<compile_context>
chip_gen: v7x
topology: tpu7x:2x2x1
jax: 0.10.0
libtpu: 0.0.40
codegen_flags: <defaults>
</compile_context>

<pallas_src>
import functools

import jax
import jax.numpy as jnp
from jax.experimental import pallas as pl
from jax.experimental.pallas import tpu as pltpu


# ----------------------------------------------------------------------------------
# Main single-pass kernel: pool -> gate -> scale on a block of whole images.
# ----------------------------------------------------------------------------------
def se_kernel(x_ref, wa_ref, b1_ref, wb_ref, b2_ref, o_ref, *, inv_hw, use_mxu):
    # Squeeze: global average pool over the true spatial extent (no padding needed).
    pooled = jnp.sum(x_ref[...].astype(jnp.float32), axis=2) * inv_hw       # (Nb, C)

    # Excite: two 1x1 convs == two small FCs.
    if use_mxu:
        # Production widths: MXU matmuls. No (Nb, w_se, C) temporary, stays off the
        # VPU/XLU slots; latency hides under the block DMA.
        s1 = jnp.dot(pooled, wa_ref[...], preferred_element_type=jnp.float32)
        s1 = jnp.maximum(s1 + b1_ref[...], 0.0)                             # (Nb, w_se)
        g = jnp.dot(s1, wb_ref[...], preferred_element_type=jnp.float32)
    else:
        # Toy widths: VPU broadcast-multiply + lane reduce (temporary is tiny; skips
        # MXU push/pop latency on the serial pool -> gate -> scale chain).
        s1 = jnp.sum(pooled[:, None, :] * wa_ref[...][None, :, :], axis=-1)
        s1 = jnp.maximum(s1 + b1_ref[...], 0.0)                             # (Nb, w_se)
        g = jnp.sum(s1[:, None, :] * wb_ref[...][None, :, :], axis=-1)
    g = jax.nn.sigmoid(g + b2_ref[...])                                     # (Nb, C)

    # Scale: re-read x from VMEM (cheaper than keeping the block live in vregs across
    # the gate chain) and broadcast the per-(image, channel) gate over spatial lanes.
    o_ref[...] = (x_ref[...].astype(jnp.float32) * g[:, :, None]).astype(o_ref.dtype)


# ----------------------------------------------------------------------------------
# Two-pass fallback kernels (used only when a whole (C, HW) image slab does not fit
# double-buffered in VMEM): pool over HW chunks, gate in plain JAX, then scale.
# ----------------------------------------------------------------------------------
def _se_pool_kernel(x_ref, sum_ref, *, hw, hw_tile):
    j = pl.program_id(1)

    @pl.when(j == 0)
    def _():
        sum_ref[...] = jnp.zeros_like(sum_ref)

    x = x_ref[...].astype(jnp.float32)                                      # (1, C, hw_tile)
    # The last HW chunk may extend past the array end (out-of-bounds reads are
    # undefined), so mask lanes beyond the true HW before reducing.
    lane = jax.lax.broadcasted_iota(jnp.int32, x.shape, 2)
    x = jnp.where(j * hw_tile + lane < hw, x, 0.0)
    sum_ref[...] += jnp.sum(x, axis=2, keepdims=True)                       # (1, C, 1)


def _se_scale_kernel(x_ref, g_ref, o_ref):
    # Out-of-bounds lanes of the tail chunk are masked on store by Pallas.
    o_ref[...] = (x_ref[...].astype(jnp.float32) * g_ref[...]).astype(o_ref.dtype)


# ----------------------------------------------------------------------------------
# Parameter preprocessing (matches pycls' weight-standardized Conv2d exactly).
# ----------------------------------------------------------------------------------
def standardize_weight(w):
    """w: (out, in, kh, kw). Mean over (in, kh, kw); unbiased std of the centered,
    flattened weight per output channel; add 1e-5; divide."""
    out = w.shape[0]
    mean = jnp.mean(w, axis=(1, 2, 3), keepdims=True)
    wc = w - mean
    std = jnp.std(wc.reshape(out, -1), axis=1, ddof=1).reshape(out, 1, 1, 1) + 1e-5
    return wc / std


# ----------------------------------------------------------------------------------
# Tuning helpers.
# ----------------------------------------------------------------------------------
def _tpu_tuning():
    """Returns (target block bytes, scoped VMEM limit to request, min grid steps)."""
    kind = ""
    try:
        kind = jax.devices()[0].device_kind.lower()
    except Exception:
        pass

    if "v7" in kind:
        # 2 TensorCores/chip, only 64 MiB physical VMEM, 3.2 TB/s HBM:
        # biggish blocks to amortize the ~0.35us/step overhead, >= 4 steps per TC.
        target_bytes, vmem_limit, min_steps = 7 << 20, 48 << 20, 8
    elif "v6" in kind:
        target_bytes, vmem_limit, min_steps = 8 << 20, 64 << 20, 2
    elif "v5 lite" in kind or "v5lite" in kind or "v5e" in kind:
        # Slower HBM: keep modest blocks, but raise the 16 MiB default scoped limit.
        target_bytes, vmem_limit, min_steps = 3 << 20, 48 << 20, 2
    else:
        target_bytes, vmem_limit, min_steps = 4 << 20, 48 << 20, 4

    # Never request more scoped VMEM than the hardware can provide.
    try:
        cap = int(pltpu.get_tpu_info().vmem_capacity_bytes)
        vmem_limit = min(vmem_limit, cap * 3 // 4)
    except Exception:
        pass
    return target_bytes, vmem_limit, min_steps


def _pick_batch_block(n, bytes_per_image, target_bytes, min_steps):
    """Largest Nb that (a) divides N, (b) keeps a block <= target_bytes,
    (c) leaves >= min_steps grid steps when N allows (pipelining / megacore)."""
    nb = max(1, min(n, target_bytes // max(bytes_per_image, 1)))
    while nb > 1 and n // nb < min_steps:
        nb -= 1
    while n % nb != 0:
        nb -= 1
    return nb


# ----------------------------------------------------------------------------------
# Wrappers.
# ----------------------------------------------------------------------------------
def _se_two_pass(x_flat, w1s, b1c, w2s, b2c, N, C, HW, out_dtype, vmem_limit,
                 hw_tile=None):
    """Fallback for feature maps too large to hold a whole (C, HW) slab in VMEM."""
    itemsize = jnp.dtype(x_flat.dtype).itemsize
    if hw_tile is None:
        # Lane-aligned spatial chunk sized so double-buffered in+out blocks use at
        # most ~1/3 of the scoped VMEM budget.
        col_bytes = C * 128 * itemsize
        max_cols = max(1, (vmem_limit // 3) // (4 * max(col_bytes, 1)))
        hw_tile = 128 * min(max_cols, pl.cdiv(HW, 128))
    n_chunks = pl.cdiv(HW, hw_tile)

    cparams = pltpu.CompilerParams(
        dimension_semantics=("parallel", "arbitrary"),
        vmem_limit_bytes=vmem_limit)

    # Pass 1: per-(image, channel) spatial sum, accumulated across HW chunks.
    sums = pl.pallas_call(
        functools.partial(_se_pool_kernel, hw=HW, hw_tile=hw_tile),
        out_shape=jax.ShapeDtypeStruct((N, C, 1), jnp.float32),
        grid_spec=pltpu.PrefetchScalarGridSpec(
            num_scalar_prefetch=0,
            grid=(N, n_chunks),
            in_specs=[pl.BlockSpec((1, C, hw_tile), lambda n, j: (n, 0, j))],
            out_specs=pl.BlockSpec((1, C, 1), lambda n, j: (n, 0, 0)),
        ),
        compiler_params=cparams,
    )(x_flat)

    # Gate (tiny): plain JAX.
    pooled = sums[:, :, 0] / float(HW)                                      # (N, C)
    hi = jax.lax.Precision.HIGHEST
    s1 = jnp.maximum(jnp.dot(pooled, w1s.T, precision=hi) + b1c, 0.0)       # (N, w_se)
    g = jax.nn.sigmoid(jnp.dot(s1, w2s.T, precision=hi) + b2c)              # (N, C)
    g = g.astype(jnp.float32)[:, :, None]                                   # (N, C, 1)

    # Pass 2: scale.
    out = pl.pallas_call(
        _se_scale_kernel,
        out_shape=jax.ShapeDtypeStruct((N, C, HW), out_dtype),
        grid_spec=pltpu.PrefetchScalarGridSpec(
            num_scalar_prefetch=0,
            grid=(N, n_chunks),
            in_specs=[pl.BlockSpec((1, C, hw_tile), lambda n, j: (n, 0, j)),
                      pl.BlockSpec((1, C, 1), lambda n, j: (n, 0, 0))],
            out_specs=pl.BlockSpec((1, C, hw_tile), lambda n, j: (n, 0, j)),
        ),
        compiler_params=cparams,
    )(x_flat, g)
    return out


def se_forward(x, w1, b1, w2, b2, *, force_two_pass=False, two_pass_hw_tile=None):
    """x: (N, C, H, W). w1: (w_se, C, 1, 1), b1: (w_se,), w2: (C, w_se, 1, 1), b2: (C,)."""
    N, C, H, W = x.shape
    HW = H * W
    w_se = w1.shape[0]
    out_dtype = x.dtype
    itemsize = jnp.dtype(x.dtype).itemsize

    # Parameter preprocessing (tiny, O(C*w_se)): weight standardization + 2-D reshape.
    w1s = standardize_weight(w1).reshape(w_se, C).astype(jnp.float32)       # (w_se, C)
    w2s = standardize_weight(w2).reshape(C, w_se).astype(jnp.float32)       # (C, w_se)
    b1c = b1.reshape(1, w_se).astype(jnp.float32)
    b2c = b2.reshape(1, C).astype(jnp.float32)

    # Contiguous reshape only -- no pad / slice HBM round trips. The kernel block's
    # last dim equals the full HW (exempt from the 128-lane divisibility rule), so a
    # non-multiple-of-128 spatial size only costs a masked tail store in-kernel.
    x_flat = x.reshape(N, C, HW)

    target_bytes, vmem_limit, min_steps = _tpu_tuning()

    bytes_per_image = C * HW * itemsize
    weight_bytes = 4 * (2 * w_se * C + w_se + C)

    Nb = _pick_batch_block(N, bytes_per_image, target_bytes, min_steps)

    def fits(nb):
        # Double-buffered in + out blocks, (conservatively) double-buffered params,
        # plus headroom for compiler scratch.
        return 4 * nb * bytes_per_image + 2 * weight_bytes + (2 << 20) <= vmem_limit

    while Nb > 1 and not fits(Nb):
        Nb -= 1
        while N % Nb != 0:
            Nb -= 1

    if force_two_pass or not fits(Nb):
        # Even a single (C, HW) image slab does not fit double-buffered in VMEM:
        # two-pass fallback (~1.5x HBM traffic but always fits).
        out = _se_two_pass(x_flat, w1s, b1c, w2s, b2c, N, C, HW, out_dtype,
                           vmem_limit, hw_tile=two_pass_hw_tile)
        return out.reshape(N, C, H, W)

    # Production channel widths -> MXU excitation; toy widths -> VPU broadcast-reduce.
    use_mxu = (C >= 128 and w_se >= 32)
    if use_mxu:
        wa, wb = w1s.T, w2s.T          # (C, w_se), (w_se, C): pooled @ wa, s1 @ wb
    else:
        wa, wb = w1s, w2s              # (w_se, C), (C, w_se): broadcast-reduce form

    grid = (N // Nb,)
    cost = pl.CostEstimate(
        flops=2 * N * C * HW + 4 * N * C * w_se,
        transcendentals=N * C,
        bytes_accessed=2 * N * C * HW * itemsize + weight_bytes,
    )
    kernel = functools.partial(se_kernel, inv_hw=1.0 / float(HW), use_mxu=use_mxu)

    out = pl.pallas_call(
        kernel,
        out_shape=jax.ShapeDtypeStruct((N, C, HW), out_dtype),
        grid_spec=pltpu.PrefetchScalarGridSpec(
            num_scalar_prefetch=0,
            grid=grid,
            in_specs=[
                pl.BlockSpec((Nb, C, HW), lambda n: (n, 0, 0)),
                # Constant index_maps: params stay resident in VMEM across steps.
                pl.BlockSpec(wa.shape, lambda n: (0, 0)),
                pl.BlockSpec((1, w_se), lambda n: (0, 0)),
                pl.BlockSpec(wb.shape, lambda n: (0, 0)),
                pl.BlockSpec((1, C), lambda n: (0, 0)),
            ],
            out_specs=pl.BlockSpec((Nb, C, HW), lambda n: (n, 0, 0)),
        ),
        compiler_params=pltpu.CompilerParams(
            dimension_semantics=("parallel",),
            vmem_limit_bytes=vmem_limit),
        cost_estimate=cost,
    )(x_flat, wa, b1c, wb, b2c)

    return out.reshape(N, C, H, W)


def se_reference(x, w1, b1, w2, b2):
    """Pure-JAX reference mirroring the PyTorch SE forward."""
    N, C, H, W = x.shape
    w_se = w1.shape[0]
    hi = jax.lax.Precision.HIGHEST
    w1s = standardize_weight(w1).reshape(w_se, C)
    w2s = standardize_weight(w2).reshape(C, w_se)
    pooled = jnp.mean(x.astype(jnp.float32), axis=(2, 3))                   # (N, C)
    s1 = jnp.maximum(jnp.dot(pooled, w1s.T, precision=hi) + b1[None, :], 0.0)
    g = jax.nn.sigmoid(jnp.dot(s1, w2s.T, precision=hi) + b2[None, :])      # (N, C)
    return (x.astype(jnp.float32) * g[:, :, None, None]).astype(x.dtype)


if __name__ == "__main__":
    def run_case(name, N, C, H, W, w_se, **kwargs):
        key = jax.random.PRNGKey(0)
        kx, kw1, kb1, kw2, kb2 = jax.random.split(key, 5)
        x = jax.random.normal(kx, (N, C, H, W), dtype=jnp.float32)
        w1 = jax.random.normal(kw1, (w_se, C, 1, 1), dtype=jnp.float32) * 0.5
        b1 = jax.random.normal(kb1, (w_se,), dtype=jnp.float32) * 0.1
        w2 = jax.random.normal(kw2, (C, w_se, 1, 1), dtype=jnp.float32) * 0.5
        b2 = jax.random.normal(kb2, (C,), dtype=jnp.float32) * 0.1

        out = jax.block_until_ready(se_forward(x, w1, b1, w2, b2, **kwargs))
        ref = jax.block_until_ready(se_reference(x, w1, b1, w2, b2))
        assert out.shape == x.shape and out.dtype == x.dtype, name
        assert jnp.allclose(out, ref, atol=2e-5, rtol=2e-5), (
            f"Pallas SE mismatch vs reference ({name})")

    # Main path, HW a multiple of 128, VPU excitation (toy channel widths).
    run_case("base", 2, 8, 16, 16, 4)
    # Main path, HW not a multiple of 128 (masked tail store, no wrapper pad/slice).
    run_case("tail", 4, 8, 14, 14, 4)
    # Main path, production-ish channel widths -> MXU excitation.
    run_case("mxu", 2, 128, 8, 8, 32)
    # Forced two-pass fallback (large-feature-map path): multi-chunk accumulation
    # with a masked tail chunk.
    run_case("two_pass", 2, 8, 14, 14, 4, force_two_pass=True, two_pass_hw_tile=128)

    print("KERNEL_OK")
</pallas_src>

<mosaic_0001>
module attributes {stable_mosaic.version = 11 : i64} {
  func.func @se_kernel(%arg0: i32, %arg1: memref<1x8x256xf32, #tpu.memory_space<vmem>>, %arg2: memref<4x8xf32, #tpu.memory_space<vmem>>, %arg3: memref<1x4xf32, #tpu.memory_space<vmem>>, %arg4: memref<8x4xf32, #tpu.memory_space<vmem>>, %arg5: memref<1x8xf32, #tpu.memory_space<vmem>>, %arg6: memref<1x8x256xf32, #tpu.memory_space<vmem>>) attributes {dimension_semantics = [#tpu.dimension_semantics<parallel>], iteration_bounds = array<i64: 2>, scalar_prefetch = 0 : i64, scratch_operands = 0 : i64, tpu.core_type = #tpu.core_type<tc>, window_params = [{transform_indices = @transform_0, window_bounds = array<i64: 1, 8, 256>}, {pipeline_mode = #tpu.pipeline_mode<synchronous>, transform_indices = @transform_1, window_bounds = array<i64: 4, 8>}, {pipeline_mode = #tpu.pipeline_mode<synchronous>, transform_indices = @transform_2, window_bounds = array<i64: 1, 4>}, {pipeline_mode = #tpu.pipeline_mode<synchronous>, transform_indices = @transform_3, window_bounds = array<i64: 8, 4>}, {pipeline_mode = #tpu.pipeline_mode<synchronous>, transform_indices = @transform_4, window_bounds = array<i64: 1, 8>}, {transform_indices = @transform_5, window_bounds = array<i64: 1, 8, 256>}]} {
    %c0 = arith.constant 0 : index
    %c0_0 = arith.constant 0 : index
    %c0_1 = arith.constant 0 : index
    %0 = vector.load %arg1[%c0, %c0_0, %c0_1] : memref<1x8x256xf32, #tpu.memory_space<vmem>>, vector<1x8x256xf32>
    %cst = arith.constant dense<0.000000e+00> : vector<1x8xf32>
    %1 = vector.multi_reduction <add>, %0, %cst [2] : vector<1x8x256xf32> to vector<1x8xf32>
    %cst_2 = arith.constant 3.906250e-03 : f32
    %2 = vector.broadcast %cst_2 : f32 to vector<1x8xf32>
    %3 = arith.mulf %1, %2 : vector<1x8xf32>
    %4 = vector.shape_cast %3 : vector<1x8xf32> to vector<1x1x8xf32>
    %c0_3 = arith.constant 0 : index
    %c0_4 = arith.constant 0 : index
    %5 = vector.load %arg2[%c0_3, %c0_4] : memref<4x8xf32, #tpu.memory_space<vmem>>, vector<4x8xf32>
    %6 = vector.shape_cast %5 : vector<4x8xf32> to vector<1x4x8xf32>
    %7 = vector.broadcast %4 : vector<1x1x8xf32> to vector<1x4x8xf32>
    %8 = arith.mulf %7, %6 : vector<1x4x8xf32>
    %cst_5 = arith.constant dense<0.000000e+00> : vector<1x4xf32>
    %9 = vector.multi_reduction <add>, %8, %cst_5 [2] : vector<1x4x8xf32> to vector<1x4xf32>
    %c0_6 = arith.constant 0 : index
    %c0_7 = arith.constant 0 : index
    %10 = vector.load %arg3[%c0_6, %c0_7] : memref<1x4xf32, #tpu.memory_space<vmem>>, vector<1x4xf32>
    %11 = arith.addf %9, %10 : vector<1x4xf32>
    %cst_8 = arith.constant 0.000000e+00 : f32
    %12 = vector.broadcast %cst_8 : f32 to vector<1x4xf32>
    %13 = arith.maximumf %11, %12 : vector<1x4xf32>
    %14 = vector.shape_cast %13 : vector<1x4xf32> to vector<1x1x4xf32>
    %c0_9 = arith.constant 0 : index
    %c0_10 = arith.constant 0 : index
    %15 = vector.load %arg4[%c0_9, %c0_10] : memref<8x4xf32, #tpu.memory_space<vmem>>, vector<8x4xf32>
    %16 = vector.shape_cast %15 : vector<8x4xf32> to vector<1x8x4xf32>
    %17 = vector.broadcast %14 : vector<1x1x4xf32> to vector<1x8x4xf32>
    %18 = arith.mulf %17, %16 : vector<1x8x4xf32>
    %cst_11 = arith.constant dense<0.000000e+00> : vector<1x8xf32>
    %19 = vector.multi_reduction <add>, %18, %cst_11 [2] : vector<1x8x4xf32> to vector<1x8xf32>
    %c0_12 = arith.constant 0 : index
    %c0_13 = arith.constant 0 : index
    %20 = vector.load %arg5[%c0_12, %c0_13] : memref<1x8xf32, #tpu.memory_space<vmem>>, vector<1x8xf32>
    %21 = arith.addf %19, %20 : vector<1x8xf32>
    %22 = arith.negf %21 : vector<1x8xf32>
    %23 = math.exp %22 : vector<1x8xf32>
    %cst_14 = arith.constant 1.000000e+00 : f32
    %24 = vector.broadcast %cst_14 : f32 to vector<1x8xf32>
    %25 = arith.addf %24, %23 : vector<1x8xf32>
    %26 = arith.divf %24, %25 : vector<1x8xf32>
    %c0_15 = arith.constant 0 : index
    %c0_16 = arith.constant 0 : index
    %c0_17 = arith.constant 0 : index
    %27 = vector.load %arg1[%c0_15, %c0_16, %c0_17] : memref<1x8x256xf32, #tpu.memory_space<vmem>>, vector<1x8x256xf32>
    %28 = vector.shape_cast %26 : vector<1x8xf32> to vector<1x8x1xf32>
    %29 = vector.broadcast %28 : vector<1x8x1xf32> to vector<1x8x256xf32>
    %30 = arith.mulf %27, %29 : vector<1x8x256xf32>
    %c0_18 = arith.constant 0 : index
    %c0_19 = arith.constant 0 : index
    %c0_20 = arith.constant 0 : index
    %31 = vector.load %arg6[%c0_18, %c0_19, %c0_20] : memref<1x8x256xf32, #tpu.memory_space<vmem>>, vector<1x8x256xf32>
    tpu.vector_store %arg6[%c0_18, %c0_19, %c0_20], %30 {strides = array<i32>} : memref<1x8x256xf32, #tpu.memory_space<vmem>>, vector<1x8x256xf32>,
    return
  }
  func.func @transform_0(%arg0: i32) -> (i32, i32, i32) {
    %c0_i32 = arith.constant 0 : i32
    %c0_i32_0 = arith.constant 0 : i32
    %c0_i32_1 = arith.constant 0 : i32
    return %arg0, %c0_i32, %c0_i32_0 : i32, i32, i32
  }
  func.func @transform_1(%arg0: i32) -> (i32, i32) {
    %c0_i32 = arith.constant 0 : i32
    %c0_i32_0 = arith.constant 0 : i32
    %c0_i32_1 = arith.constant 0 : i32
    return %c0_i32, %c0_i32_0 : i32, i32
  }
  func.func @transform_2(%arg0: i32) -> (i32, i32) {
    %c0_i32 = arith.constant 0 : i32
    %c0_i32_0 = arith.constant 0 : i32
    %c0_i32_1 = arith.constant 0 : i32
    return %c0_i32, %c0_i32_0 : i32, i32
  }
  func.func @transform_3(%arg0: i32) -> (i32, i32) {
    %c0_i32 = arith.constant 0 : i32
    %c0_i32_0 = arith.constant 0 : i32
    %c0_i32_1 = arith.constant 0 : i32
    return %c0_i32, %c0_i32_0 : i32, i32
  }
  func.func @transform_4(%arg0: i32) -> (i32, i32) {
    %c0_i32 = arith.constant 0 : i32
    %c0_i32_0 = arith.constant 0 : i32
    %c0_i32_1 = arith.constant 0 : i32
    return %c0_i32, %c0_i32_0 : i32, i32
  }
  func.func @transform_5(%arg0: i32) -> (i32, i32, i32) {
    %c0_i32 = arith.constant 0 : i32
    %c0_i32_0 = arith.constant 0 : i32
    %c0_i32_1 = arith.constant 0 : i32
    return %arg0, %c0_i32, %c0_i32_0 : i32, i32, i32
  }
}

</mosaic_0001>

<llo_original>
// kernel: tpu_custom_call.1
$region0: #{tpu_custom_call.1}
  #allocation0 [shape = 'u32[]', space=smem, size = 0x4, offset = 0x4, fixed_abs, tag = 'smem constant byte address 0x4 - core index']
  #allocation1 [shape = 'u32[144,128]{1,0:T(1,128)}', space=vmem, size = 0x12000, scoped, tag = 'internal scratch']
  %s0 = inlined_call_operand.hbm [shape: f32[2,8,256], index: 0, kind: input, shape index: {}]
  %s1 = inlined_call_operand.vmem [shape: f32[4,8], index: 1, kind: input, shape index: {}]
  %s2 = inlined_call_operand.vmem [shape: f32[1,4], index: 2, kind: input, shape index: {}]
  %s3 = inlined_call_operand.vmem [shape: f32[8,4], index: 3, kind: input, shape index: {}]
  %s4 = inlined_call_operand.vmem [shape: f32[1,8], index: 4, kind: input, shape index: {}]
  %s5 = inlined_call_operand.hbm [shape: f32[2,8,256], index: 5, kind: output, shape index: {}]
  %s6 = sld [smem:[#allocation0]]
  $region57: #{tpu_custom_call.1} parent=0
    _
  %s8 = ssub.s32 1, %s6
  %s9 = scalar_select 0, %s8, %s6
  $region1: #{tpu_custom_call.1} parent=0
    #allocation2 [shape = 'u8[16384]{0}', space=vmem, size = 0x4000, scoped, tag = 'input window, operand 0']
    #allocation3 [shape = 's32[2]{0}', space=sflag, size = 0x8, scoped, tag = 'scoped memory for tpu_custom_call.1']
    #allocation4 [shape = 's32[2]{0}', space=sflag, size = 0x8, scoped, tag = 'scoped memory for tpu_custom_call.1']
    #allocation5 [shape = 'u8[16384]{0}', space=vmem, size = 0x4000, scoped, tag = 'output window, operand 0']
    %10 = vsyncpa [#allocation3], 0
    %s11 = scalar_lea.sflag [#allocation3], 1
    %12 = vsyncpa %s11, 0
    %13 = vsyncpa [#allocation4], 0
    %s14 = scalar_lea.sflag [#allocation4], 1
    %15 = vsyncpa %s14, 0
    loop: start=0, step=1, limit=4
    $region2: #{tpu_custom_call.1} parent=1 // loop_pre_header
      _
    $region3: #{tpu_custom_call.1} parent=1 // loop_header
      %s17 = sphi 0, %s21
      %p18 = scmp.ge.s32.totalorder %s17, 4
      %s27 = sphi 0, %s29
      %s30 = sphi 0, %s27
      %s31 = sphi 0, %s30
      %s47 = sphi 0, %s31
      %s51 = sphi 0, %s51
      %s53 = sphi 0, %s51
      %s54 = sphi 0, %s53
      %s68 = sphi 0, %s54
      %s72 = sphi 0, %s72
      %s74 = sphi 0, %s72
      %s75 = sphi 0, %s74
      %s89 = sphi 0, %s75
      %s93 = sphi 0, %s93
      %s95 = sphi 0, %s93
      %s96 = sphi 0, %s95
      %s110 = sphi 0, %s96
      %s114 = sphi 0, %s114
      %s116 = sphi 0, %s114
      %s117 = sphi 0, %s116
      %s131 = sphi 0, %s117
      %s137 = sphi 0, %s139
      %s140 = sphi 0, %s137
      %s141 = sphi 0, %s140
      %s157 = sphi 0, %s141
    $region4: #{tpu_custom_call.1} parent=1 // loop_header_branch
      %20 = sbr.rel (%p18) target = $region8
    $region5: #{tpu_custom_call.1} parent=1 // loop_body
      %s22 = ssub.s32 %s17, 1
      %s23 = ssub.s32 %s17, 2
      %s24 = sadd.s32 %s17, 1
      %s25 = ssub.s32 %s17, %s24
      %p26 = scmp.eq.s32.totalorder %s25, 0
      %s28 = sadd.s32 %s27, 1
      %s29 = scalar_select %p26, %s27, %s28
      %p32 = pneg %p26
      %p33 = scmp.eq.s32.totalorder %s17, 1
      %p34 = por %p32, %p33
      %p35 = scmp.ne.s32.totalorder %s27, %s30
      %p36 = scmp.eq.s32.totalorder %s17, 0
      %p37 = por %p35, %p36
      %p38 = scmp.ne.s32.totalorder %s27, %s30
      %p39 = scmp.eq.s32.totalorder %s22, 1
      %p40 = por %p38, %p39
      %p41 = scmp.ne.s32.totalorder %s30, %s31
      %p42 = scmp.eq.s32.totalorder %s22, 0
      %p43 = por %p41, %p42
      %p44 = scmp.ne.s32.totalorder %s30, %s31
      %p45 = scmp.eq.s32.totalorder %s23, 1
      %p46 = por %p44, %p45
      %p48 = scmp.ne.s32.totalorder %s31, %s47
      %p49 = scmp.eq.s32.totalorder %s23, 0
      %p50 = por %p48, %p49
      %s52 = sadd.s32 %s51, 1
      %p55 = scmp.eq.s32.totalorder %s17, 1
      %p56 = scmp.ne.s32.totalorder %s51, %s53
      %p57 = scmp.eq.s32.totalorder %s17, 0
      %p58 = por %p56, %p57
      %p59 = scmp.ne.s32.totalorder %s51, %s53
      %p60 = scmp.eq.s32.totalorder %s22, 1
      %p61 = por %p59, %p60
      %p62 = scmp.ne.s32.totalorder %s53, %s54
      %p63 = scmp.eq.s32.totalorder %s22, 0
      %p64 = por %p62, %p63
      %p65 = scmp.ne.s32.totalorder %s53, %s54
      %p66 = scmp.eq.s32.totalorder %s23, 1
      %p67 = por %p65, %p66
      %p69 = scmp.ne.s32.totalorder %s54, %s68
      %p70 = scmp.eq.s32.totalorder %s23, 0
      %p71 = por %p69, %p70
      %s73 = sadd.s32 %s72, 1
      %p76 = scmp.eq.s32.totalorder %s17, 1
      %p77 = scmp.ne.s32.totalorder %s72, %s74
      %p78 = scmp.eq.s32.totalorder %s17, 0
      %p79 = por %p77, %p78
      %p80 = scmp.ne.s32.totalorder %s72, %s74
      %p81 = scmp.eq.s32.totalorder %s22, 1
      %p82 = por %p80, %p81
      %p83 = scmp.ne.s32.totalorder %s74, %s75
      %p84 = scmp.eq.s32.totalorder %s22, 0
      %p85 = por %p83, %p84
      %p86 = scmp.ne.s32.totalorder %s74, %s75
      %p87 = scmp.eq.s32.totalorder %s23, 1
      %p88 = por %p86, %p87
      %p90 = scmp.ne.s32.totalorder %s75, %s89
      %p91 = scmp.eq.s32.totalorder %s23, 0
      %p92 = por %p90, %p91
      %s94 = sadd.s32 %s93, 1
      %p97 = scmp.eq.s32.totalorder %s17, 1
      %p98 = scmp.ne.s32.totalorder %s93, %s95
      %p99 = scmp.eq.s32.totalorder %s17, 0
      %p100 = por %p98, %p99
      %p101 = scmp.ne.s32.totalorder %s93, %s95
      %p102 = scmp.eq.s32.totalorder %s22, 1
      %p103 = por %p101, %p102
      %p104 = scmp.ne.s32.totalorder %s95, %s96
      %p105 = scmp.eq.s32.totalorder %s22, 0
      %p106 = por %p104, %p105
      %p107 = scmp.ne.s32.totalorder %s95, %s96
      %p108 = scmp.eq.s32.totalorder %s23, 1
      %p109 = por %p107, %p108
      %p111 = scmp.ne.s32.totalorder %s96, %s110
      %p112 = scmp.eq.s32.totalorder %s23, 0
      %p113 = por %p111, %p112
      %s115 = sadd.s32 %s114, 1
      %p118 = scmp.eq.s32.totalorder %s17, 1
      %p119 = scmp.ne.s32.totalorder %s114, %s116
      %p120 = scmp.eq.s32.totalorder %s17, 0
      %p121 = por %p119, %p120
      %p122 = scmp.ne.s32.totalorder %s114, %s116
      %p123 = scmp.eq.s32.totalorder %s22, 1
      %p124 = por %p122, %p123
      %p125 = scmp.ne.s32.totalorder %s116, %s117
      %p126 = scmp.eq.s32.totalorder %s22, 0
      %p127 = por %p125, %p126
      %p128 = scmp.ne.s32.totalorder %s116, %s117
      %p129 = scmp.eq.s32.totalorder %s23, 1
      %p130 = por %p128, %p129
      %p132 = scmp.ne.s32.totalorder %s117, %s131
      %p133 = scmp.eq.s32.totalorder %s23, 0
      %p134 = por %p132, %p133
      %s135 = ssub.s32 %s17, %s24
      %p136 = scmp.eq.s32.totalorder %s135, 0
      %s138 = sadd.s32 %s137, 1
      %s139 = scalar_select %p136, %s137, %s138
      %p142 = pneg %p136
      %p143 = scmp.eq.s32.totalorder %s17, 1
      %p144 = por %p142, %p143
      %p145 = scmp.ne.s32.totalorder %s137, %s140
      %p146 = scmp.eq.s32.totalorder %s17, 0
      %p147 = por %p145, %p146
      %p148 = scmp.ne.s32.totalorder %s137, %s140
      %p149 = scmp.eq.s32.totalorder %s22, 1
      %p150 = por %p148, %p149
      %p151 = scmp.ne.s32.totalorder %s140, %s141
      %p152 = scmp.eq.s32.totalorder %s22, 0
      %p153 = por %p151, %p152
      %p154 = scmp.ne.s32.totalorder %s140, %s141
      %p155 = scmp.eq.s32.totalorder %s23, 1
      %p156 = por %p154, %p155
      %p158 = scmp.ne.s32.totalorder %s141, %s157
      %p159 = scmp.eq.s32.totalorder %s23, 0
      %p160 = por %p158, %p159
      %p161 = scmp.le.s32.totalorder 1, %s17
      %p162 = scmp.lt.s32.totalorder %s17, 3
      %p163 = pnand %p161, %p162
      %p164 = pneg %p163
      // Predicated region
      $region9: #{tpu_custom_call.1} parent=5 // pred_check
        _
      $region10: #{tpu_custom_call.1} parent=5 // pred_check_branch
        %166 = sbr.rel (%p163) target = $region12
      $region11: #{tpu_custom_call.1} parent=5 // pred_region
        %s167 = ssub.s32 %s17, 1
        // Predicated region
        $region13: #{tpu_custom_call.1} parent=11 // pred_check
          %p168 = pneg %p64
        $region14: #{tpu_custom_call.1} parent=11 // pred_check_branch
          %170 = sbr.rel (%p168) target = $region16
        $region15: #{tpu_custom_call.1} parent=11 // pred_region
          _
        $region16: #{tpu_custom_call.1} parent=11 // pred_fallthru
          _
        // Predicated region
        $region17: #{tpu_custom_call.1} parent=11 // pred_check
          %p171 = pneg %p85
        $region18: #{tpu_custom_call.1} parent=11 // pred_check_branch
          %173 = sbr.rel (%p171) target = $region20
        $region19: #{tpu_custom_call.1} parent=11 // pred_region
          _
        $region20: #{tpu_custom_call.1} parent=11 // pred_fallthru
          _
        // Predicated region
        $region21: #{tpu_custom_call.1} parent=11 // pred_check
          %p174 = pneg %p106
        $region22: #{tpu_custom_call.1} parent=11 // pred_check_branch
          %176 = sbr.rel (%p174) target = $region24
        $region23: #{tpu_custom_call.1} parent=11 // pred_region
          _
        $region24: #{tpu_custom_call.1} parent=11 // pred_fallthru
          _
        // Predicated region
        $region25: #{tpu_custom_call.1} parent=11 // pred_check
          %p177 = pneg %p127
        $region26: #{tpu_custom_call.1} parent=11 // pred_check_branch
          %179 = sbr.rel (%p177) target = $region28
        $region27: #{tpu_custom_call.1} parent=11 // pred_region
          _
        $region28: #{tpu_custom_call.1} parent=11 // pred_fallthru
          _
      $region12: #{tpu_custom_call.1} parent=5 // pred_fallthru
        _
      %p180 = scmp.lt.s32.totalorder %s17, 2
      // Predicated region
      $region29: #{tpu_custom_call.1} parent=5 // pred_check
        %p181 = pneg %p180
      $region30: #{tpu_custom_call.1} parent=5 // pred_check_branch
        %183 = sbr.rel (%p181) target = $region32
      $region31: #{tpu_custom_call.1} parent=5 // pred_region
        // Predicated region
        $region33: #{tpu_custom_call.1} parent=31 // pred_check
          %p184 = pneg %p37
        $region34: #{tpu_custom_call.1} parent=31 // pred_check_branch
          %186 = sbr.rel (%p184) target = $region36
        $region35: #{tpu_custom_call.1} parent=31 // pred_region
          %s187 = sand.u32 %s27, 1
          %s188 = scalar_lea.sflag [#allocation3], %s187
          %s189 = sand.u32 %s27, 1
          %s190 = smul.addr %s189, 16
          %s191 = scalar_lea.vmem [#allocation2], %s190
          %s193 = ssub.s32 256, 256
          %194 = vsyncadd %s188, %s193
          %s195 = smul.addr %s17, 2
          %s196 = smul.addr %s195, 128
          %s197 = scalar_lea.hbm %s0, %s196
          %s199 = sshll.u32 %s191, 4
          %s200 = int_to_ptr.vmem [resolvable:$true] %s199
          %202 = dma.hbm_to_vmem [thread:$0]  %s197, 256, %s200, %s188
        $region36: #{tpu_custom_call.1} parent=31 // pred_fallthru
          _
      $region32: #{tpu_custom_call.1} parent=5 // pred_fallthru
        _
      %p203 = scmp.le.s32.totalorder 1, %s17
      %p204 = scmp.lt.s32.totalorder %s17, 3
      %p205 = pnand %p203, %p204
      %p206 = pneg %p205
      // Predicated region
      $region37: #{tpu_custom_call.1} parent=5 // pred_check
        _
      $region38: #{tpu_custom_call.1} parent=5 // pred_check_branch
        %208 = sbr.rel (%p205) target = $region40
      $region39: #{tpu_custom_call.1} parent=5 // pred_region
        %s209 = ssub.s32 %s17, 1
        %s210 = sand.u32 %s30, 1
        %s211 = scalar_lea.sflag [#allocation3], %s210
        %s212 = sand.u32 %s30, 1
        %s213 = smul.addr %s212, 16
        %s214 = scalar_lea.vmem [#allocation2], %s213
        // Predicated region
        $region41: #{tpu_custom_call.1} parent=39 // pred_check
          %p215 = pneg %p43
        $region42: #{tpu_custom_call.1} parent=39 // pred_check_branch
          %217 = sbr.rel (%p215) target = $region44
        $region43: #{tpu_custom_call.1} parent=39 // pred_region
          %218 = dma.done %s211, 256
        $region44: #{tpu_custom_call.1} parent=39 // pred_fallthru
          _
        %s219 = sand.u32 %s30, 1
        %s220 = scalar_lea.sflag [#allocation3], %s219
        %s221 = sand.u32 %s30, 1
        %s222 = smul.addr %s221, 16
        %s223 = scalar_lea.vmem [#allocation2], %s222
        %p224 = pneg %p43
        %p225 = pneg %p40
        %p226 = pneg %p64
        %p227 = pneg %p61
        %p228 = pneg %p85
        %p229 = pneg %p82
        %p230 = pneg %p106
        %p231 = pneg %p103
        %p232 = pneg %p127
        %p233 = pneg %p124
        %p234 = pneg %p153
        %p235 = pneg %p150
        %s236 = sand.u32 %s140, 1
        %s237 = scalar_lea.sflag [#allocation4], %s236
        %s238 = sand.u32 %s140, 1
        %s239 = smul.addr %s238, 16
        %s240 = scalar_lea.vmem [#allocation5], %s239
        %v241 = vld [vmem:[%s214] sm:$0xff]
        %v242 = vld [vmem:[%s214 + $0x8] sm:$0xff]
        %v243 = vadd.f32 %v241, %v242
        %244 = vadd.xlane.f32.xlu0 %v243
        %v245 = vpop.xlane.xlu0 %244
        %v246 = vmul.f32 %v245, 0.00390625
        %v247 = vld [vmem:[%s1] sm:$0xf]
        %v249 = vlaneseq
        %v250 = vshrl.u32 %v249, 7
        %v251 = vsub.s32 0, %v250
        %v252 = vrot.slane %v247, %v251
        %254 = vbcast.lane.b32.xlu0 %v252, 256
        %v255 = vpop.permute.xlu0 %254
        %v256 = vlaneseq
        %v257 = vshrl.u32 %v256, 7
        %v258 = vsub.s32 1, %v257
        %v259 = vrot.slane %v247, %v258
        %261 = vbcast.lane.b32.xlu0 %v259, 256
        %v262 = vpop.permute.xlu0 %261
        %v263 = vlaneseq
        %v264 = vshrl.u32 %v263, 7
        %v265 = vsub.s32 2, %v264
        %v266 = vrot.slane %v247, %v265
        %268 = vbcast.lane.b32.xlu0 %v266, 256
        %v269 = vpop.permute.xlu0 %268
        %v270 = vlaneseq
        %v271 = vshrl.u32 %v270, 7
        %v272 = vsub.s32 3, %v271
        %v273 = vrot.slane %v247, %v272
        %275 = vbcast.lane.b32.xlu0 %v273, 256
        %v276 = vpop.permute.xlu0 %275
        %v281 = vmul.f32 %v246, %v255
        %v282 = vmul.f32 %v246, %v262
        %v283 = vmul.f32 %v246, %v269
        %v284 = vmul.f32 %v246, %v276
        %289 = vset.pattern.permute.xlu0 0
        %290 = vperm.xlu0 %289, %v281
        %v291 = vpop.permute.xlu0 %290
        %292 = vset.pattern.permute.xlu0 0
        %293 = vperm.xlu0 %292, %v282
        %v294 = vpop.permute.xlu0 %293
        %295 = vset.pattern.permute.xlu0 0
        %296 = vperm.xlu0 %295, %v283
        %v297 = vpop.permute.xlu0 %296
        %298 = vset.pattern.permute.xlu0 0
        %299 = vperm.xlu0 %298, %v284
        %v300 = vpop.permute.xlu0 %299
        %v301 = vlaneseq
        %v302 = vand.u32 %v301, 127
        %v303 = vlaneseq
        %v304 = vshrl.u32 %v303, 7
        %v305 = vsub.s32 %v302, %v304
        %v306 = vrot.slane %v291, %v305
        %v307 = vlaneseq
        %v308 = vshrl.u32 %v307, 7
        %v309 = vsub.s32 %v302, %v308
        %v310 = vrot.slane %v294, %v309
        %v311 = vlaneseq
        %v312 = vshrl.u32 %v311, 7
        %v313 = vsub.s32 %v302, %v312
        %v314 = vrot.slane %v297, %v313
        %v315 = vlaneseq
        %v316 = vshrl.u32 %v315, 7
        %v317 = vsub.s32 %v302, %v316
        %v318 = vrot.slane %v300, %v317
        %vm319 = vcmask 1041409
        %v320 = vsel %vm319, %v310, %v306
        %vm321 = vcmask 1042434
        %v322 = vsel %vm321, %v314, %v320
        %vm323 = vcmask 1043459
        %v324 = vsel %vm323, %v318, %v322
        %vm326 = vcmask 60416
        %v327 = vsel %vm326, %v324, 0.0
        %328 = vadd.xlane.f32.xlu0 %v327
        %v329 = vpop.xlane.xlu0 %328
        %v330 = vld [vmem:[%s2] sm:$0x1]
        %v332 = vlaneseq
        %v333 = vshrl.u32 %v332, 7
        %v334 = vsub.s32 0, %v333
        %v335 = vrot.slane %v330, %v334
        %337 = vbcast.lane.b32.xlu0 %v335, 256
        %v338 = vpop.permute.xlu0 %337
        %v340 = vadd.f32 %v329, %v338
        %v341 = vmax.f32 %v340, 0.0
        %v342 = vld [vmem:[%s3] sm:$0xff]
        %v344 = vlaneseq
        %v345 = vshrl.u32 %v344, 7
        %v346 = vsub.s32 0, %v345
        %v347 = vrot.slane %v342, %v346
        %349 = vbcast.lane.b32.xlu0 %v347, 256
        %v350 = vpop.permute.xlu0 %349
        %v351 = vlaneseq
        %v352 = vshrl.u32 %v351, 7
        %v353 = vsub.s32 1, %v352
        %v354 = vrot.slane %v342, %v353
        %356 = vbcast.lane.b32.xlu0 %v354, 256
        %v357 = vpop.permute.xlu0 %356
        %v358 = vlaneseq
        %v359 = vshrl.u32 %v358, 7
        %v360 = vsub.s32 2, %v359
        %v361 = vrot.slane %v342, %v360
        %363 = vbcast.lane.b32.xlu0 %v361, 256
        %v364 = vpop.permute.xlu0 %363
        %v365 = vlaneseq
        %v366 = vshrl.u32 %v365, 7
        %v367 = vsub.s32 3, %v366
        %v368 = vrot.slane %v342, %v367
        %370 = vbcast.lane.b32.xlu0 %v368, 256
        %v371 = vpop.permute.xlu0 %370
        %v372 = vlaneseq
        %v373 = vshrl.u32 %v372, 7
        %v374 = vsub.s32 4, %v373
        %v375 = vrot.slane %v342, %v374
        %377 = vbcast.lane.b32.xlu0 %v375, 256
        %v378 = vpop.permute.xlu0 %377
        %v379 = vlaneseq
        %v380 = vshrl.u32 %v379, 7
        %v381 = vsub.s32 5, %v380
        %v382 = vrot.slane %v342, %v381
        %384 = vbcast.lane.b32.xlu0 %v382, 256
        %v385 = vpop.permute.xlu0 %384
        %v386 = vlaneseq
        %v387 = vshrl.u32 %v386, 7
        %v388 = vsub.s32 6, %v387
        %v389 = vrot.slane %v342, %v388
        %391 = vbcast.lane.b32.xlu0 %v389, 256
        %v392 = vpop.permute.xlu0 %391
        %v393 = vlaneseq
        %v394 = vshrl.u32 %v393, 7
        %v395 = vsub.s32 7, %v394
        %v396 = vrot.slane %v342, %v395
        %398 = vbcast.lane.b32.xlu0 %v396, 256
        %v399 = vpop.permute.xlu0 %398
        %v408 = vmul.f32 %v341, %v350
        %v409 = vmul.f32 %v341, %v357
        %v410 = vmul.f32 %v341, %v364
        %v411 = vmul.f32 %v341, %v371
        %v412 = vmul.f32 %v341, %v378
        %v413 = vmul.f32 %v341, %v385
        %v414 = vmul.f32 %v341, %v392
        %v415 = vmul.f32 %v341, %v399
        %424 = vset.pattern.permute.xlu0 0
        %425 = vperm.xlu0 %424, %v408
        %v426 = vpop.permute.xlu0 %425
        %427 = vset.pattern.permute.xlu0 0
        %428 = vperm.xlu0 %427, %v409
        %v429 = vpop.permute.xlu0 %428
        %430 = vset.pattern.permute.xlu0 0
        %431 = vperm.xlu0 %430, %v410
        %v432 = vpop.permute.xlu0 %431
        %433 = vset.pattern.permute.xlu0 0
        %434 = vperm.xlu0 %433, %v411
        %v435 = vpop.permute.xlu0 %434
        %436 = vset.pattern.permute.xlu0 0
        %437 = vperm.xlu0 %436, %v412
        %v438 = vpop.permute.xlu0 %437
        %439 = vset.pattern.permute.xlu0 0
        %440 = vperm.xlu0 %439, %v413
        %v441 = vpop.permute.xlu0 %440
        %442 = vset.pattern.permute.xlu0 0
        %443 = vperm.xlu0 %442, %v414
        %v444 = vpop.permute.xlu0 %443
        %445 = vset.pattern.permute.xlu0 0
        %446 = vperm.xlu0 %445, %v415
        %v447 = vpop.permute.xlu0 %446
        %v448 = vlaneseq
        %v449 = vshrl.u32 %v448, 7
        %v450 = vsub.s32 %v302, %v449
        %v451 = vrot.slane %v426, %v450
        %v452 = vlaneseq
        %v453 = vshrl.u32 %v452, 7
        %v454 = vsub.s32 %v302, %v453
        %v455 = vrot.slane %v429, %v454
        %v456 = vlaneseq
        %v457 = vshrl.u32 %v456, 7
        %v458 = vsub.s32 %v302, %v457
        %v459 = vrot.slane %v432, %v458
        %v460 = vlaneseq
        %v461 = vshrl.u32 %v460, 7
        %v462 = vsub.s32 %v302, %v461
        %v463 = vrot.slane %v435, %v462
        %v464 = vlaneseq
        %v465 = vshrl.u32 %v464, 7
        %v466 = vsub.s32 %v302, %v465
        %v467 = vrot.slane %v438, %v466
        %v468 = vlaneseq
        %v469 = vshrl.u32 %v468, 7
        %v470 = vsub.s32 %v302, %v469
        %v471 = vrot.slane %v441, %v470
        %v472 = vlaneseq
        %v473 = vshrl.u32 %v472, 7
        %v474 = vsub.s32 %v302, %v473
        %v475 = vrot.slane %v444, %v474
        %v476 = vlaneseq
        %v477 = vshrl.u32 %v476, 7
        %v478 = vsub.s32 %v302, %v477
        %v479 = vrot.slane %v447, %v478
        %v480 = vsel %vm319, %v455, %v451
        %v481 = vsel %vm321, %v459, %v480
        %v482 = vsel %vm323, %v463, %v481
        %vm483 = vcmask 1044484
        %v484 = vsel %vm483, %v467, %v482
        %vm485 = vcmask 1045509
        %v486 = vsel %vm485, %v471, %v484
        %vm487 = vcmask 1046534
        %v488 = vsel %vm487, %v475, %v486
        %vm489 = vcmask 1047559
        %v490 = vsel %vm489, %v479, %v488
        %vm492 = vcmask 31744
        %v493 = vsel %vm492, %v490, 0.0
        %494 = vadd.xlane.f32.xlu0 %v493
        %v495 = vpop.xlane.xlu0 %494
        %v496 = vld [vmem:[%s4] sm:$0x1]
        %v498 = vlaneseq
        %v499 = vshrl.u32 %v498, 7
        %v500 = vsub.s32 0, %v499
        %v501 = vrot.slane %v496, %v500
        %503 = vbcast.lane.b32.xlu0 %v501, 256
        %v504 = vpop.permute.xlu0 %503
        %v506 = vadd.f32 %v495, %v504
        %v507 = vxor.u32 %v506, 2147483648
        %v508 = vmul.f32 %v507, 1.442695
        %v509 = vpow.pop %v508
        %v510 = vadd.f32 %v509, 1.0
        %v511 = vrcp.pop %v510
        %v512 = vmul.f32 1.0, %v511
        %514 = vset.pattern.permute.xlu0 0
        %515 = vperm.xlu0 %514, %v512
        %v516 = vpop.permute.xlu0 %515
        %v518 = vmul.f32 %v241, %v516
        %v519 = vmul.f32 %v242, %v516
        %520 = vst [vmem:[%s240] sm:$0xff] %v518
        %521 = vst [vmem:[%s240 + $0x8] sm:$0xff] %v519
        %s522 = sand.u32 %s140, 1
        %s523 = scalar_lea.sflag [#allocation4], %s522
        %s524 = sand.u32 %s140, 1
        %s525 = smul.addr %s524, 16
        %s526 = scalar_lea.vmem [#allocation5], %s525
        // Predicated region
        $region45: #{tpu_custom_call.1} parent=39 // pred_check
          %p527 = pneg %p150
        $region46: #{tpu_custom_call.1} parent=39 // pred_check_branch
          %529 = sbr.rel (%p527) target = $region48
        $region47: #{tpu_custom_call.1} parent=39 // pred_region
          %s531 = ssub.s32 256, 256
          %532 = vsyncadd %s523, %s531
          %s533 = smul.addr %s22, 2
          %s534 = smul.addr %s533, 128
          %s535 = scalar_lea.hbm %s5, %s534
          %s537 = sshll.u32 %s526, 4
          %s538 = int_to_ptr.vmem [resolvable:$true] %s537
          %540 = dma.vmem_to_hbm [thread:$0]  %s538, 256, %s535, %s523
        $region48: #{tpu_custom_call.1} parent=39 // pred_fallthru
          _
      $region40: #{tpu_custom_call.1} parent=5 // pred_fallthru
        _
      %p541 = scmp.le.s32.totalorder 2, %s17
      // Predicated region
      $region49: #{tpu_custom_call.1} parent=5 // pred_check
        %p542 = pneg %p541
      $region50: #{tpu_custom_call.1} parent=5 // pred_check_branch
        %544 = sbr.rel (%p542) target = $region52
      $region51: #{tpu_custom_call.1} parent=5 // pred_region
        %s545 = ssub.s32 %s17, 2
        // Predicated region
        $region53: #{tpu_custom_call.1} parent=51 // pred_check
          %p546 = pneg %p156
        $region54: #{tpu_custom_call.1} parent=51 // pred_check_branch
          %548 = sbr.rel (%p546) target = $region56
        $region55: #{tpu_custom_call.1} parent=51 // pred_region
          %s549 = sand.u32 %s141, 1
          %s550 = scalar_lea.sflag [#allocation4], %s549
          %s551 = sand.u32 %s141, 1
          %s552 = smul.addr %s551, 16
          %s553 = scalar_lea.vmem [#allocation5], %s552
          %554 = dma.done %s550, 256
        $region56: #{tpu_custom_call.1} parent=51 // pred_fallthru
          _
      $region52: #{tpu_custom_call.1} parent=5 // pred_fallthru
        _
    $region6: #{tpu_custom_call.1} parent=1 // loop_footer
      %s21 = sadd.s32 1, %s17
    $region7: #{tpu_custom_call.1} parent=1 // loop_footer_branch
      %16 = sbr.rel target = $region3
    $region8: #{tpu_custom_call.1} parent=1 // loop_exit
      _
    %555 = vsyncpa [#allocation3], 1
    %s556 = scalar_lea.sflag [#allocation3], 1
    %557 = vsyncpa %s556, 1
    %558 = vsyncpa [#allocation4], 1
    %s559 = scalar_lea.sflag [#allocation4], 1
    %560 = vsyncpa %s559, 1

</llo_original>
